<compile_context>
chip_gen: v5e
topology: v5e:2x2
jax: 0.10.0
libtpu: 0.0.40
codegen_flags: <defaults>
</compile_context>

<pallas_src>
import jax
import jax.numpy as jnp
from jax.experimental import pallas as pl
from jax.experimental.pallas import tpu as pltpu

EPS = 1e-5  # PyTorch BatchNorm1d default eps


# ----------------------------------------------------------------------------
# Kernel
# ----------------------------------------------------------------------------
def model_kernel(x_ref, wih_t_ref, whh_t_ref, packed_ref, out_ref):
    L, D = x_ref.shape
    H = whh_t_ref.shape[0]

    x = x_ref[...].astype(jnp.float32)                        # (L, D)

    # --- unpack the single packed-parameter DMA ---
    row0 = packed_ref[0:1, :]                                  # (1, 128)
    g1 = row0[:, 0:D]
    g2 = row0[:, D:2 * D]
    b2 = row0[:, 2 * D:3 * D]
    wl_row = row0[:, 3 * D:3 * D + H]                          # g3 * wl^T, (1, H)
    bprime = row0[:, 3 * D + H:3 * D + H + 1]                  # b3 @ wl^T + bl, (1, 1)
    bg = packed_ref[1:2, 0:4 * H]                              # fused LSTM bias (1, 4H)
    gate_scale = packed_ref[2:3, 0:4 * H]                      # 0.5 i/f/o lanes, 1.0 g lanes

    # --- two stacked BatchNorm1d(D), fused into one pass (b1 cancels) ---
    # bn1: y = xc * r1 * g1 + b1, r1 = rsqrt(var + eps)
    # bn2 stats of y: mean = b1 (exact), biased var = g1^2 * var * r1^2
    m = jnp.mean(x, axis=0, keepdims=True)
    xc = x - m
    var = jnp.mean(xc * xc, axis=0, keepdims=True)
    r1 = jax.lax.rsqrt(var + EPS)
    var2 = (g1 * g1) * var * (r1 * r1)
    r2 = jax.lax.rsqrt(var2 + EPS)
    x = xc * (r1 * g1 * r2 * g2) + b2                          # == bn2(bn1(x))

    # --- LSTM (single layer, unbatched), fully unrolled recurrence ---
    # All input projections in one MXU matmul: (L, 4H)
    xg = jnp.dot(x, wih_t_ref[...],
                 preferred_element_type=jnp.float32) + bg
    whh_t = whh_t_ref[...]                                     # (H, 4H)

    h = jnp.zeros((1, H), jnp.float32)
    c = jnp.zeros((1, H), jnp.float32)
    hs_list = []
    for t in range(L):                                         # static unroll, L=8
        gates = xg[t:t + 1, :] + jnp.dot(h, whh_t,
                                         preferred_element_type=jnp.float32)
        # One EUP pass over the gates: tanh(gates * scale).
        # sigmoid(x) = 0.5 * (1 + tanh(x/2)) on the i/f/o lanes (scale 0.5);
        # the g lanes keep scale 1.0 and use tanh directly.
        tt = jnp.tanh(gates * gate_scale)                      # (1, 4H)
        sg = 0.5 + 0.5 * tt                                    # sigmoid on i/f/o lanes
        i = sg[:, 0:H]
        f = sg[:, H:2 * H]
        g = tt[:, 2 * H:3 * H]
        o = sg[:, 3 * H:4 * H]
        c = f * c + i * g
        h = o * jnp.tanh(c)
        hs_list.append(h)
    hs = jnp.concatenate(hs_list, axis=0)                      # (L, H), stays in vregs

    # --- BatchNorm1d(H) with affine folded into the Linear(H,1) head ---
    m3 = jnp.mean(hs, axis=0, keepdims=True)
    hc = hs - m3
    var3 = jnp.mean(hc * hc, axis=0, keepdims=True)
    r3 = jax.lax.rsqrt(var3 + EPS)
    # VPU multiply + lane reduce instead of an N=1 MXU matmul.
    y = jnp.sum(hc * (r3 * wl_row), axis=-1, keepdims=True) + bprime   # (L, 1)
    out_ref[...] = jnp.maximum(y, 0.0)


# ----------------------------------------------------------------------------
# Host-side wrapper
# ----------------------------------------------------------------------------
def pack_params(p):
    """One-time host-side packing / folding of all small parameters."""
    D = p["g1"].shape[1]
    H = p["whh_t"].shape[0]
    W = max(128, 4 * H)
    assert 3 * D + H + 1 <= W and 4 * H <= W

    row0 = jnp.zeros((W,), jnp.float32)
    row0 = row0.at[0:D].set(p["g1"][0])
    row0 = row0.at[D:2 * D].set(p["g2"][0])
    row0 = row0.at[2 * D:3 * D].set(p["b2"][0])
    wl_row = (p["g3"] * p["wl_t"].T)[0]                        # (H,)  g3 * wl^T
    row0 = row0.at[3 * D:3 * D + H].set(wl_row)
    bprime = (p["b3"] @ p["wl_t"] + p["bl"])[0, 0]             # scalar
    row0 = row0.at[3 * D + H].set(bprime)

    row1 = jnp.zeros((W,), jnp.float32).at[0:4 * H].set(p["bg"][0])

    lane = jnp.arange(W)
    scale = jnp.where((lane >= 2 * H) & (lane < 3 * H), 1.0, 0.5).astype(jnp.float32)
    row2 = jnp.where(lane < 4 * H, scale, 0.0)

    packed = jnp.stack([row0, row1, row2], axis=0)             # (3, W)
    return p["wih_t"], p["whh_t"], packed


def model_forward(x, wih_t, whh_t, packed):
    L = x.shape[0]
    vmem = pl.BlockSpec(memory_space=pltpu.MemorySpace.VMEM)
    return pl.pallas_call(
        model_kernel,
        out_shape=jax.ShapeDtypeStruct((L, 1), jnp.float32),
        in_specs=[vmem, vmem, vmem, vmem],
        out_specs=vmem,
    )(x, wih_t, whh_t, packed)


# ----------------------------------------------------------------------------
# Pure-JAX reference (literal, un-fused math) for correctness checking
# ----------------------------------------------------------------------------
def _bn(v, gamma, beta):
    m = jnp.mean(v, axis=0, keepdims=True)
    var = jnp.mean((v - m) ** 2, axis=0, keepdims=True)        # biased variance
    return (v - m) * jax.lax.rsqrt(var + EPS) * gamma + beta


def reference_forward(x, p):
    x = _bn(x, p["g1"], p["b1"])
    x = _bn(x, p["g2"], p["b2"])
    H = p["whh_t"].shape[0]
    xg = x @ p["wih_t"] + p["bg"]

    def step(carry, xg_t):
        h, c = carry
        gates = xg_t[None, :] + h @ p["whh_t"]
        i = jax.nn.sigmoid(gates[:, 0:H])
        f = jax.nn.sigmoid(gates[:, H:2 * H])
        g = jnp.tanh(gates[:, 2 * H:3 * H])
        o = jax.nn.sigmoid(gates[:, 3 * H:4 * H])
        c = f * c + i * g
        h = o * jnp.tanh(c)
        return (h, c), h[0]

    h0 = jnp.zeros((1, H), jnp.float32)
    c0 = jnp.zeros((1, H), jnp.float32)
    _, hs = jax.lax.scan(step, (h0, c0), xg)
    hs = _bn(hs, p["g3"], p["b3"])
    y = hs @ p["wl_t"] + p["bl"]
    return jnp.maximum(y, 0.0)


# ----------------------------------------------------------------------------
# Parameter construction (PyTorch-style initialisation, pre-transposed weights)
# ----------------------------------------------------------------------------
def make_params(key, D, H):
    ks = jax.random.split(key, 12)
    k_lstm = 1.0 / jnp.sqrt(jnp.float32(H))
    k_lin = 1.0 / jnp.sqrt(jnp.float32(H))
    u = lambda k, shape, s: jax.random.uniform(
        k, shape, jnp.float32, minval=-s, maxval=s)

    w_ih = u(ks[0], (4 * H, D), k_lstm)                        # PyTorch (4H, D)
    w_hh = u(ks[1], (4 * H, H), k_lstm)                        # PyTorch (4H, H)
    b_ih = u(ks[2], (4 * H,), k_lstm)
    b_hh = u(ks[3], (4 * H,), k_lstm)
    w_lin = u(ks[4], (1, H), k_lin)                            # PyTorch (1, H)
    b_lin = u(ks[5], (1,), k_lin)

    return {
        # BatchNorm affine params (deterministic, non-trivial) as (1, N) rows.
        "g1": 1.0 + 0.1 * jax.random.normal(ks[6], (1, D), jnp.float32),
        "b1": 0.1 * jax.random.normal(ks[7], (1, D), jnp.float32),
        "g2": 1.0 + 0.1 * jax.random.normal(ks[8], (1, D), jnp.float32),
        "b2": 0.1 * jax.random.normal(ks[9], (1, D), jnp.float32),
        "g3": 1.0 + 0.1 * jax.random.normal(ks[10], (1, H), jnp.float32),
        "b3": 0.1 * jax.random.normal(ks[11], (1, H), jnp.float32),
        # LSTM weights, pre-transposed so the kernel does x @ W^T directly.
        "wih_t": w_ih.T,                                       # (D, 4H)
        "whh_t": w_hh.T,                                       # (H, 4H)
        "bg": (b_ih + b_hh)[None, :],                          # (1, 4H)
        # Linear head, pre-transposed.
        "wl_t": w_lin.T,                                       # (H, 1)
        "bl": b_lin[None, :],                                  # (1, 1)
    }


if __name__ == "__main__":
    L, D, H = 8, 16, 32                                        # seq, input, hidden
    key = jax.random.PRNGKey(0)
    kx, kp = jax.random.split(key)
    x = jax.random.normal(kx, (L, D), jnp.float32)
    params = make_params(kp, D, H)

    wih_t, whh_t, packed = pack_params(params)                 # one-time host packing
    out = jax.block_until_ready(model_forward(x, wih_t, whh_t, packed))
    ref = jax.block_until_ready(reference_forward(x, params))

    assert out.shape == (L, 1)
    assert jnp.allclose(out, ref, atol=1e-4, rtol=1e-4), (out, ref)
    print("KERNEL_OK")
</pallas_src>

<mosaic_0001>
module attributes {stable_mosaic.version = 11 : i64} {
  func.func @model_kernel(%arg0: memref<8x16xf32, #tpu.memory_space<vmem>>, %arg1: memref<16x128xf32, #tpu.memory_space<vmem>>, %arg2: memref<32x128xf32, #tpu.memory_space<vmem>>, %arg3: memref<3x128xf32, #tpu.memory_space<vmem>>, %arg4: memref<8x1xf32, #tpu.memory_space<vmem>>) attributes {dimension_semantics = [], scalar_prefetch = 0 : i64, scratch_operands = 0 : i64, tpu.core_type = #tpu.core_type<tc>} {
    %c0 = arith.constant 0 : index
    %c0_0 = arith.constant 0 : index
    %0 = vector.load %arg0[%c0, %c0_0] : memref<8x16xf32, #tpu.memory_space<vmem>>, vector<8x16xf32>
    %c0_1 = arith.constant 0 : index
    %c0_2 = arith.constant 0 : index
    %1 = vector.load %arg3[%c0_1, %c0_2] : memref<3x128xf32, #tpu.memory_space<vmem>>, vector<1x128xf32>
    %2 = vector.extract_strided_slice %1 {offsets = [0, 0], sizes = [1, 16], strides = [1, 1]} : vector<1x128xf32> to vector<1x16xf32>
    %3 = vector.extract_strided_slice %1 {offsets = [0, 16], sizes = [1, 16], strides = [1, 1]} : vector<1x128xf32> to vector<1x16xf32>
    %4 = vector.extract_strided_slice %1 {offsets = [0, 32], sizes = [1, 16], strides = [1, 1]} : vector<1x128xf32> to vector<1x16xf32>
    %5 = vector.extract_strided_slice %1 {offsets = [0, 48], sizes = [1, 32], strides = [1, 1]} : vector<1x128xf32> to vector<1x32xf32>
    %6 = vector.extract_strided_slice %1 {offsets = [0, 80], sizes = [1, 1], strides = [1, 1]} : vector<1x128xf32> to vector<1x1xf32>
    %c1 = arith.constant 1 : index
    %c0_3 = arith.constant 0 : index
    %7 = vector.load %arg3[%c1, %c0_3] : memref<3x128xf32, #tpu.memory_space<vmem>>, vector<1x128xf32>
    %c2 = arith.constant 2 : index
    %c0_4 = arith.constant 0 : index
    %8 = vector.load %arg3[%c2, %c0_4] : memref<3x128xf32, #tpu.memory_space<vmem>>, vector<1x128xf32>
    %cst = arith.constant dense<0.000000e+00> : vector<16xf32>
    %9 = vector.multi_reduction <add>, %0, %cst [0] : vector<8x16xf32> to vector<16xf32>
    %10 = vector.shape_cast %9 : vector<16xf32> to vector<1x16xf32>
    %cst_5 = arith.constant 8.000000e+00 : f32
    %11 = vector.broadcast %cst_5 : f32 to vector<1x16xf32>
    %12 = arith.divf %10, %11 : vector<1x16xf32>
    %13 = vector.broadcast %12 : vector<1x16xf32> to vector<8x16xf32>
    %14 = arith.subf %0, %13 : vector<8x16xf32>
    %15 = arith.mulf %14, %14 : vector<8x16xf32>
    %cst_6 = arith.constant dense<0.000000e+00> : vector<16xf32>
    %16 = vector.multi_reduction <add>, %15, %cst_6 [0] : vector<8x16xf32> to vector<16xf32>
    %17 = vector.shape_cast %16 : vector<16xf32> to vector<1x16xf32>
    %cst_7 = arith.constant 8.000000e+00 : f32
    %18 = vector.broadcast %cst_7 : f32 to vector<1x16xf32>
    %19 = arith.divf %17, %18 : vector<1x16xf32>
    %cst_8 = arith.constant 9.99999974E-6 : f32
    %20 = vector.broadcast %cst_8 : f32 to vector<1x16xf32>
    %21 = arith.addf %19, %20 : vector<1x16xf32>
    %22 = math.rsqrt %21 : vector<1x16xf32>
    %23 = arith.mulf %2, %2 : vector<1x16xf32>
    %24 = arith.mulf %23, %19 : vector<1x16xf32>
    %25 = arith.mulf %22, %22 : vector<1x16xf32>
    %26 = arith.mulf %24, %25 : vector<1x16xf32>
    %cst_9 = arith.constant 9.99999974E-6 : f32
    %27 = vector.broadcast %cst_9 : f32 to vector<1x16xf32>
    %28 = arith.addf %26, %27 : vector<1x16xf32>
    %29 = math.rsqrt %28 : vector<1x16xf32>
    %30 = arith.mulf %22, %2 : vector<1x16xf32>
    %31 = arith.mulf %30, %29 : vector<1x16xf32>
    %32 = arith.mulf %31, %3 : vector<1x16xf32>
    %33 = vector.broadcast %32 : vector<1x16xf32> to vector<8x16xf32>
    %34 = arith.mulf %14, %33 : vector<8x16xf32>
    %35 = vector.broadcast %4 : vector<1x16xf32> to vector<8x16xf32>
    %36 = arith.addf %34, %35 : vector<8x16xf32>
    %c0_10 = arith.constant 0 : index
    %c0_11 = arith.constant 0 : index
    %37 = vector.load %arg1[%c0_10, %c0_11] : memref<16x128xf32, #tpu.memory_space<vmem>>, vector<16x128xf32>
    %cst_12 = arith.constant dense<0.000000e+00> : vector<8x128xf32>
    %38 = tpu.matmul %36, %37, %cst_12 {dimension_numbers = #tpu.dot_dimension_numbers<[1], [0], [0], [1], [0, 0, 1, 1], [], []>} : vector<8x16xf32>, vector<16x128xf32>, vector<8x128xf32> -> vector<8x128xf32>
    %39 = vector.broadcast %7 : vector<1x128xf32> to vector<8x128xf32>
    %40 = arith.addf %38, %39 : vector<8x128xf32>
    %c0_13 = arith.constant 0 : index
    %c0_14 = arith.constant 0 : index
    %41 = vector.load %arg2[%c0_13, %c0_14] : memref<32x128xf32, #tpu.memory_space<vmem>>, vector<32x128xf32>
    %cst_15 = arith.constant 0.000000e+00 : f32
    %42 = vector.broadcast %cst_15 : f32 to vector<1x32xf32>
    %cst_16 = arith.constant 0.000000e+00 : f32
    %43 = vector.broadcast %cst_16 : f32 to vector<1x32xf32>
    %44 = vector.extract_strided_slice %40 {offsets = [0, 0], sizes = [1, 128], strides = [1, 1]} : vector<8x128xf32> to vector<1x128xf32>
    %cst_17 = arith.constant dense<0.000000e+00> : vector<1x128xf32>
    %45 = tpu.matmul %42, %41, %cst_17 {dimension_numbers = #tpu.dot_dimension_numbers<[1], [0], [0], [1], [0, 0, 1, 1], [], []>} : vector<1x32xf32>, vector<32x128xf32>, vector<1x128xf32> -> vector<1x128xf32>
    %46 = arith.addf %44, %45 : vector<1x128xf32>
    %47 = arith.mulf %46, %8 : vector<1x128xf32>
    %48 = math.tanh %47 : vector<1x128xf32>
    %cst_18 = arith.constant 5.000000e-01 : f32
    %49 = vector.broadcast %cst_18 : f32 to vector<1x128xf32>
    %50 = arith.mulf %49, %48 : vector<1x128xf32>
    %cst_19 = arith.constant 5.000000e-01 : f32
    %51 = vector.broadcast %cst_19 : f32 to vector<1x128xf32>
    %52 = arith.addf %51, %50 : vector<1x128xf32>
    %53 = vector.extract_strided_slice %52 {offsets = [0, 0], sizes = [1, 32], strides = [1, 1]} : vector<1x128xf32> to vector<1x32xf32>
    %54 = vector.extract_strided_slice %52 {offsets = [0, 32], sizes = [1, 32], strides = [1, 1]} : vector<1x128xf32> to vector<1x32xf32>
    %55 = vector.extract_strided_slice %48 {offsets = [0, 64], sizes = [1, 32], strides = [1, 1]} : vector<1x128xf32> to vector<1x32xf32>
    %56 = vector.extract_strided_slice %52 {offsets = [0, 96], sizes = [1, 32], strides = [1, 1]} : vector<1x128xf32> to vector<1x32xf32>
    %57 = arith.mulf %54, %43 : vector<1x32xf32>
    %58 = arith.mulf %53, %55 : vector<1x32xf32>
    %59 = arith.addf %57, %58 : vector<1x32xf32>
    %60 = math.tanh %59 : vector<1x32xf32>
    %61 = arith.mulf %56, %60 : vector<1x32xf32>
    %62 = vector.extract_strided_slice %40 {offsets = [1, 0], sizes = [1, 128], strides = [1, 1]} : vector<8x128xf32> to vector<1x128xf32>
    %cst_20 = arith.constant dense<0.000000e+00> : vector<1x128xf32>
    %63 = tpu.matmul %61, %41, %cst_20 {dimension_numbers = #tpu.dot_dimension_numbers<[1], [0], [0], [1], [0, 0, 1, 1], [], []>} : vector<1x32xf32>, vector<32x128xf32>, vector<1x128xf32> -> vector<1x128xf32>
    %64 = arith.addf %62, %63 : vector<1x128xf32>
    %65 = arith.mulf %64, %8 : vector<1x128xf32>
    %66 = math.tanh %65 : vector<1x128xf32>
    %cst_21 = arith.constant 5.000000e-01 : f32
    %67 = vector.broadcast %cst_21 : f32 to vector<1x128xf32>
    %68 = arith.mulf %67, %66 : vector<1x128xf32>
    %cst_22 = arith.constant 5.000000e-01 : f32
    %69 = vector.broadcast %cst_22 : f32 to vector<1x128xf32>
    %70 = arith.addf %69, %68 : vector<1x128xf32>
    %71 = vector.extract_strided_slice %70 {offsets = [0, 0], sizes = [1, 32], strides = [1, 1]} : vector<1x128xf32> to vector<1x32xf32>
    %72 = vector.extract_strided_slice %70 {offsets = [0, 32], sizes = [1, 32], strides = [1, 1]} : vector<1x128xf32> to vector<1x32xf32>
    %73 = vector.extract_strided_slice %66 {offsets = [0, 64], sizes = [1, 32], strides = [1, 1]} : vector<1x128xf32> to vector<1x32xf32>
    %74 = vector.extract_strided_slice %70 {offsets = [0, 96], sizes = [1, 32], strides = [1, 1]} : vector<1x128xf32> to vector<1x32xf32>
    %75 = arith.mulf %72, %59 : vector<1x32xf32>
    %76 = arith.mulf %71, %73 : vector<1x32xf32>
    %77 = arith.addf %75, %76 : vector<1x32xf32>
    %78 = math.tanh %77 : vector<1x32xf32>
    %79 = arith.mulf %74, %78 : vector<1x32xf32>
    %80 = vector.extract_strided_slice %40 {offsets = [2, 0], sizes = [1, 128], strides = [1, 1]} : vector<8x128xf32> to vector<1x128xf32>
    %cst_23 = arith.constant dense<0.000000e+00> : vector<1x128xf32>
    %81 = tpu.matmul %79, %41, %cst_23 {dimension_numbers = #tpu.dot_dimension_numbers<[1], [0], [0], [1], [0, 0, 1, 1], [], []>} : vector<1x32xf32>, vector<32x128xf32>, vector<1x128xf32> -> vector<1x128xf32>
    %82 = arith.addf %80, %81 : vector<1x128xf32>
    %83 = arith.mulf %82, %8 : vector<1x128xf32>
    %84 = math.tanh %83 : vector<1x128xf32>
    %cst_24 = arith.constant 5.000000e-01 : f32
    %85 = vector.broadcast %cst_24 : f32 to vector<1x128xf32>
    %86 = arith.mulf %85, %84 : vector<1x128xf32>
    %cst_25 = arith.constant 5.000000e-01 : f32
    %87 = vector.broadcast %cst_25 : f32 to vector<1x128xf32>
    %88 = arith.addf %87, %86 : vector<1x128xf32>
    %89 = vector.extract_strided_slice %88 {offsets = [0, 0], sizes = [1, 32], strides = [1, 1]} : vector<1x128xf32> to vector<1x32xf32>
    %90 = vector.extract_strided_slice %88 {offsets = [0, 32], sizes = [1, 32], strides = [1, 1]} : vector<1x128xf32> to vector<1x32xf32>
    %91 = vector.extract_strided_slice %84 {offsets = [0, 64], sizes = [1, 32], strides = [1, 1]} : vector<1x128xf32> to vector<1x32xf32>
    %92 = vector.extract_strided_slice %88 {offsets = [0, 96], sizes = [1, 32], strides = [1, 1]} : vector<1x128xf32> to vector<1x32xf32>
    %93 = arith.mulf %90, %77 : vector<1x32xf32>
    %94 = arith.mulf %89, %91 : vector<1x32xf32>
    %95 = arith.addf %93, %94 : vector<1x32xf32>
    %96 = math.tanh %95 : vector<1x32xf32>
    %97 = arith.mulf %92, %96 : vector<1x32xf32>
    %98 = vector.extract_strided_slice %40 {offsets = [3, 0], sizes = [1, 128], strides = [1, 1]} : vector<8x128xf32> to vector<1x128xf32>
    %cst_26 = arith.constant dense<0.000000e+00> : vector<1x128xf32>
    %99 = tpu.matmul %97, %41, %cst_26 {dimension_numbers = #tpu.dot_dimension_numbers<[1], [0], [0], [1], [0, 0, 1, 1], [], []>} : vector<1x32xf32>, vector<32x128xf32>, vector<1x128xf32> -> vector<1x128xf32>
    %100 = arith.addf %98, %99 : vector<1x128xf32>
    %101 = arith.mulf %100, %8 : vector<1x128xf32>
    %102 = math.tanh %101 : vector<1x128xf32>
    %cst_27 = arith.constant 5.000000e-01 : f32
    %103 = vector.broadcast %cst_27 : f32 to vector<1x128xf32>
    %104 = arith.mulf %103, %102 : vector<1x128xf32>
    %cst_28 = arith.constant 5.000000e-01 : f32
    %105 = vector.broadcast %cst_28 : f32 to vector<1x128xf32>
    %106 = arith.addf %105, %104 : vector<1x128xf32>
    %107 = vector.extract_strided_slice %106 {offsets = [0, 0], sizes = [1, 32], strides = [1, 1]} : vector<1x128xf32> to vector<1x32xf32>
    %108 = vector.extract_strided_slice %106 {offsets = [0, 32], sizes = [1, 32], strides = [1, 1]} : vector<1x128xf32> to vector<1x32xf32>
    %109 = vector.extract_strided_slice %102 {offsets = [0, 64], sizes = [1, 32], strides = [1, 1]} : vector<1x128xf32> to vector<1x32xf32>
    %110 = vector.extract_strided_slice %106 {offsets = [0, 96], sizes = [1, 32], strides = [1, 1]} : vector<1x128xf32> to vector<1x32xf32>
    %111 = arith.mulf %108, %95 : vector<1x32xf32>
    %112 = arith.mulf %107, %109 : vector<1x32xf32>
    %113 = arith.addf %111, %112 : vector<1x32xf32>
    %114 = math.tanh %113 : vector<1x32xf32>
    %115 = arith.mulf %110, %114 : vector<1x32xf32>
    %116 = vector.extract_strided_slice %40 {offsets = [4, 0], sizes = [1, 128], strides = [1, 1]} : vector<8x128xf32> to vector<1x128xf32>
    %cst_29 = arith.constant dense<0.000000e+00> : vector<1x128xf32>
    %117 = tpu.matmul %115, %41, %cst_29 {dimension_numbers = #tpu.dot_dimension_numbers<[1], [0], [0], [1], [0, 0, 1, 1], [], []>} : vector<1x32xf32>, vector<32x128xf32>, vector<1x128xf32> -> vector<1x128xf32>
    %118 = arith.addf %116, %117 : vector<1x128xf32>
    %119 = arith.mulf %118, %8 : vector<1x128xf32>
    %120 = math.tanh %119 : vector<1x128xf32>
    %cst_30 = arith.constant 5.000000e-01 : f32
    %121 = vector.broadcast %cst_30 : f32 to vector<1x128xf32>
    %122 = arith.mulf %121, %120 : vector<1x128xf32>
    %cst_31 = arith.constant 5.000000e-01 : f32
    %123 = vector.broadcast %cst_31 : f32 to vector<1x128xf32>
    %124 = arith.addf %123, %122 : vector<1x128xf32>
    %125 = vector.extract_strided_slice %124 {offsets = [0, 0], sizes = [1, 32], strides = [1, 1]} : vector<1x128xf32> to vector<1x32xf32>
    %126 = vector.extract_strided_slice %124 {offsets = [0, 32], sizes = [1, 32], strides = [1, 1]} : vector<1x128xf32> to vector<1x32xf32>
    %127 = vector.extract_strided_slice %120 {offsets = [0, 64], sizes = [1, 32], strides = [1, 1]} : vector<1x128xf32> to vector<1x32xf32>
    %128 = vector.extract_strided_slice %124 {offsets = [0, 96], sizes = [1, 32], strides = [1, 1]} : vector<1x128xf32> to vector<1x32xf32>
    %129 = arith.mulf %126, %113 : vector<1x32xf32>
    %130 = arith.mulf %125, %127 : vector<1x32xf32>
    %131 = arith.addf %129, %130 : vector<1x32xf32>
    %132 = math.tanh %131 : vector<1x32xf32>
    %133 = arith.mulf %128, %132 : vector<1x32xf32>
    %134 = vector.extract_strided_slice %40 {offsets = [5, 0], sizes = [1, 128], strides = [1, 1]} : vector<8x128xf32> to vector<1x128xf32>
    %cst_32 = arith.constant dense<0.000000e+00> : vector<1x128xf32>
    %135 = tpu.matmul %133, %41, %cst_32 {dimension_numbers = #tpu.dot_dimension_numbers<[1], [0], [0], [1], [0, 0, 1, 1], [], []>} : vector<1x32xf32>, vector<32x128xf32>, vector<1x128xf32> -> vector<1x128xf32>
    %136 = arith.addf %134, %135 : vector<1x128xf32>
    %137 = arith.mulf %136, %8 : vector<1x128xf32>
    %138 = math.tanh %137 : vector<1x128xf32>
    %cst_33 = arith.constant 5.000000e-01 : f32
    %139 = vector.broadcast %cst_33 : f32 to vector<1x128xf32>
    %140 = arith.mulf %139, %138 : vector<1x128xf32>
    %cst_34 = arith.constant 5.000000e-01 : f32
    %141 = vector.broadcast %cst_34 : f32 to vector<1x128xf32>
    %142 = arith.addf %141, %140 : vector<1x128xf32>
    %143 = vector.extract_strided_slice %142 {offsets = [0, 0], sizes = [1, 32], strides = [1, 1]} : vector<1x128xf32> to vector<1x32xf32>
    %144 = vector.extract_strided_slice %142 {offsets = [0, 32], sizes = [1, 32], strides = [1, 1]} : vector<1x128xf32> to vector<1x32xf32>
    %145 = vector.extract_strided_slice %138 {offsets = [0, 64], sizes = [1, 32], strides = [1, 1]} : vector<1x128xf32> to vector<1x32xf32>
    %146 = vector.extract_strided_slice %142 {offsets = [0, 96], sizes = [1, 32], strides = [1, 1]} : vector<1x128xf32> to vector<1x32xf32>
    %147 = arith.mulf %144, %131 : vector<1x32xf32>
    %148 = arith.mulf %143, %145 : vector<1x32xf32>
    %149 = arith.addf %147, %148 : vector<1x32xf32>
    %150 = math.tanh %149 : vector<1x32xf32>
    %151 = arith.mulf %146, %150 : vector<1x32xf32>
    %152 = vector.extract_strided_slice %40 {offsets = [6, 0], sizes = [1, 128], strides = [1, 1]} : vector<8x128xf32> to vector<1x128xf32>
    %cst_35 = arith.constant dense<0.000000e+00> : vector<1x128xf32>
    %153 = tpu.matmul %151, %41, %cst_35 {dimension_numbers = #tpu.dot_dimension_numbers<[1], [0], [0], [1], [0, 0, 1, 1], [], []>} : vector<1x32xf32>, vector<32x128xf32>, vector<1x128xf32> -> vector<1x128xf32>
    %154 = arith.addf %152, %153 : vector<1x128xf32>
    %155 = arith.mulf %154, %8 : vector<1x128xf32>
    %156 = math.tanh %155 : vector<1x128xf32>
    %cst_36 = arith.constant 5.000000e-01 : f32
    %157 = vector.broadcast %cst_36 : f32 to vector<1x128xf32>
    %158 = arith.mulf %157, %156 : vector<1x128xf32>
    %cst_37 = arith.constant 5.000000e-01 : f32
    %159 = vector.broadcast %cst_37 : f32 to vector<1x128xf32>
    %160 = arith.addf %159, %158 : vector<1x128xf32>
    %161 = vector.extract_strided_slice %160 {offsets = [0, 0], sizes = [1, 32], strides = [1, 1]} : vector<1x128xf32> to vector<1x32xf32>
    %162 = vector.extract_strided_slice %160 {offsets = [0, 32], sizes = [1, 32], strides = [1, 1]} : vector<1x128xf32> to vector<1x32xf32>
    %163 = vector.extract_strided_slice %156 {offsets = [0, 64], sizes = [1, 32], strides = [1, 1]} : vector<1x128xf32> to vector<1x32xf32>
    %164 = vector.extract_strided_slice %160 {offsets = [0, 96], sizes = [1, 32], strides = [1, 1]} : vector<1x128xf32> to vector<1x32xf32>
    %165 = arith.mulf %162, %149 : vector<1x32xf32>
    %166 = arith.mulf %161, %163 : vector<1x32xf32>
    %167 = arith.addf %165, %166 : vector<1x32xf32>
    %168 = math.tanh %167 : vector<1x32xf32>
    %169 = arith.mulf %164, %168 : vector<1x32xf32>
    %170 = vector.extract_strided_slice %40 {offsets = [7, 0], sizes = [1, 128], strides = [1, 1]} : vector<8x128xf32> to vector<1x128xf32>
    %cst_38 = arith.constant dense<0.000000e+00> : vector<1x128xf32>
    %171 = tpu.matmul %169, %41, %cst_38 {dimension_numbers = #tpu.dot_dimension_numbers<[1], [0], [0], [1], [0, 0, 1, 1], [], []>} : vector<1x32xf32>, vector<32x128xf32>, vector<1x128xf32> -> vector<1x128xf32>
    %172 = arith.addf %170, %171 : vector<1x128xf32>
    %173 = arith.mulf %172, %8 : vector<1x128xf32>
    %174 = math.tanh %173 : vector<1x128xf32>
    %cst_39 = arith.constant 5.000000e-01 : f32
    %175 = vector.broadcast %cst_39 : f32 to vector<1x128xf32>
    %176 = arith.mulf %175, %174 : vector<1x128xf32>
    %cst_40 = arith.constant 5.000000e-01 : f32
    %177 = vector.broadcast %cst_40 : f32 to vector<1x128xf32>
    %178 = arith.addf %177, %176 : vector<1x128xf32>
    %179 = vector.extract_strided_slice %178 {offsets = [0, 0], sizes = [1, 32], strides = [1, 1]} : vector<1x128xf32> to vector<1x32xf32>
    %180 = vector.extract_strided_slice %178 {offsets = [0, 32], sizes = [1, 32], strides = [1, 1]} : vector<1x128xf32> to vector<1x32xf32>
    %181 = vector.extract_strided_slice %174 {offsets = [0, 64], sizes = [1, 32], strides = [1, 1]} : vector<1x128xf32> to vector<1x32xf32>
    %182 = vector.extract_strided_slice %178 {offsets = [0, 96], sizes = [1, 32], strides = [1, 1]} : vector<1x128xf32> to vector<1x32xf32>
    %183 = arith.mulf %180, %167 : vector<1x32xf32>
    %184 = arith.mulf %179, %181 : vector<1x32xf32>
    %185 = arith.addf %183, %184 : vector<1x32xf32>
    %186 = math.tanh %185 : vector<1x32xf32>
    %187 = arith.mulf %182, %186 : vector<1x32xf32>
    %188 = tpu.concatenate %61, %79, %97, %115, %133, %151, %169, %187 in 0 : vector<1x32xf32>, vector<1x32xf32>, vector<1x32xf32>, vector<1x32xf32>, vector<1x32xf32>, vector<1x32xf32>, vector<1x32xf32>, vector<1x32xf32> -> vector<8x32xf32>
    %cst_41 = arith.constant dense<0.000000e+00> : vector<32xf32>
    %189 = vector.multi_reduction <add>, %188, %cst_41 [0] : vector<8x32xf32> to vector<32xf32>
    %190 = vector.shape_cast %189 : vector<32xf32> to vector<1x32xf32>
    %cst_42 = arith.constant 8.000000e+00 : f32
    %191 = vector.broadcast %cst_42 : f32 to vector<1x32xf32>
    %192 = arith.divf %190, %191 : vector<1x32xf32>
    %193 = vector.broadcast %192 : vector<1x32xf32> to vector<8x32xf32>
    %194 = arith.subf %188, %193 : vector<8x32xf32>
    %195 = arith.mulf %194, %194 : vector<8x32xf32>
    %cst_43 = arith.constant dense<0.000000e+00> : vector<32xf32>
    %196 = vector.multi_reduction <add>, %195, %cst_43 [0] : vector<8x32xf32> to vector<32xf32>
    %197 = vector.shape_cast %196 : vector<32xf32> to vector<1x32xf32>
    %cst_44 = arith.constant 8.000000e+00 : f32
    %198 = vector.broadcast %cst_44 : f32 to vector<1x32xf32>
    %199 = arith.divf %197, %198 : vector<1x32xf32>
    %cst_45 = arith.constant 9.99999974E-6 : f32
    %200 = vector.broadcast %cst_45 : f32 to vector<1x32xf32>
    %201 = arith.addf %199, %200 : vector<1x32xf32>
    %202 = math.rsqrt %201 : vector<1x32xf32>
    %203 = arith.mulf %202, %5 : vector<1x32xf32>
    %204 = vector.broadcast %203 : vector<1x32xf32> to vector<8x32xf32>
    %205 = arith.mulf %194, %204 : vector<8x32xf32>
    %cst_46 = arith.constant dense<0.000000e+00> : vector<8xf32>
    %206 = vector.multi_reduction <add>, %205, %cst_46 [1] : vector<8x32xf32> to vector<8xf32>
    %207 = vector.shape_cast %206 : vector<8xf32> to vector<8x1xf32>
    %208 = vector.broadcast %6 : vector<1x1xf32> to vector<8x1xf32>
    %209 = arith.addf %207, %208 : vector<8x1xf32>
    %cst_47 = arith.constant 0.000000e+00 : f32
    %210 = vector.broadcast %cst_47 : f32 to vector<8x1xf32>
    %211 = arith.maximumf %209, %210 : vector<8x1xf32>
    %c0_48 = arith.constant 0 : index
    %c0_49 = arith.constant 0 : index
    %212 = vector.load %arg4[%c0_48, %c0_49] : memref<8x1xf32, #tpu.memory_space<vmem>>, vector<8x1xf32>
    tpu.vector_store %arg4[%c0_48, %c0_49], %211 {strides = array<i32>} : memref<8x1xf32, #tpu.memory_space<vmem>>, vector<8x1xf32>,
    return
  }
}

</mosaic_0001>

<llo_original>
// kernel: tpu_custom_call.1
$region0: #{tpu_custom_call.1}
  #allocation0 [shape = 'u32[]', space=smem, size = 0x4, offset = 0x4, fixed_abs, tag = 'smem constant byte address 0x4 - core index']
  #allocation1 [shape = 'u32[72,128]{1,0:T(1,128)}', space=vmem, size = 0x9000, scoped, tag = 'internal scratch']
  %s0 = inlined_call_operand.hbm [shape: f32[8,16], index: 0, kind: input, shape index: {}]
  %s1 = inlined_call_operand.hbm [shape: f32[16,128], index: 1, kind: input, shape index: {}]
  %s2 = inlined_call_operand.hbm [shape: f32[32,128], index: 2, kind: input, shape index: {}]
  %s3 = inlined_call_operand.hbm [shape: f32[3,128], index: 3, kind: input, shape index: {}]
  %s4 = inlined_call_operand.vmem [shape: f32[8,1], index: 4, kind: output, shape index: {}]
  %s5 = sld [smem:[#allocation0]]
  $region42: #{tpu_custom_call.1} parent=0
    _
  %s7 = ssub.s32 1, %s5
  %s8 = scalar_select 0, %s7, %s5
  $region1: #{tpu_custom_call.1} parent=0
    #allocation2 [shape = 'u8[4096]{0}', space=vmem, size = 0x1000, scoped, tag = 'input window, operand 0, single buffered']
    #allocation3 [shape = 's32[1]{0}', space=sflag, size = 0x4, scoped, tag = 'scoped memory for tpu_custom_call.1']
    #allocation4 [shape = 'u8[8192]{0}', space=vmem, size = 0x2000, scoped, tag = 'input window, operand 1, single buffered']
    #allocation5 [shape = 's32[1]{0}', space=sflag, size = 0x4, scoped, tag = 'scoped memory for tpu_custom_call.1']
    #allocation6 [shape = 'u8[16384]{0}', space=vmem, size = 0x4000, scoped, tag = 'input window, operand 2, single buffered']
    #allocation7 [shape = 'u8[2048]{0}', space=vmem, size = 0x800, scoped, tag = 'input window, operand 3, single buffered']
    #allocation8 [shape = 's32[1]{0}', space=sflag, size = 0x4, scoped, tag = 'scoped memory for tpu_custom_call.1']
    %9 = vsyncpa [#allocation3], 0
    %10 = vsyncpa [#allocation5], 0
    %11 = vsyncpa [#allocation8], 0
    // Predicated region
    $region2: #{tpu_custom_call.1} parent=1 // pred_check
      _
    $region3: #{tpu_custom_call.1} parent=1 // pred_check_branch
      %13 = sbr.rel (0) target = $region5
    $region4: #{tpu_custom_call.1} parent=1 // pred_region
      %15 = vsyncadd [#allocation3], 0
      %s17 = sshll.u32 %s0, 4
      %s18 = int_to_ptr.hbm [resolvable:$true] %s17
      %s19 = sshll.u32 [#allocation2], 4
      %s20 = int_to_ptr.vmem [resolvable:$true] %s19
      %22 = dma.hbm_to_vmem [thread:$0]  %s18, 128, %s20, [#allocation3]
    $region5: #{tpu_custom_call.1} parent=1 // pred_fallthru
      _
    // Predicated region
    $region6: #{tpu_custom_call.1} parent=1 // pred_check
      _
    $region7: #{tpu_custom_call.1} parent=1 // pred_check_branch
      %24 = sbr.rel (0) target = $region9
    $region8: #{tpu_custom_call.1} parent=1 // pred_region
      %26 = vsyncadd [#allocation5], 0
      %s27 = sshll.u32 %s1, 4
      %s28 = int_to_ptr.hbm [resolvable:$true] %s27
      %s29 = sshll.u32 [#allocation4], 4
      %s30 = int_to_ptr.vmem [resolvable:$true] %s29
      %35 = dma.hbm_to_vmem [thread:$0]  %s28, 256, %s30, [#allocation5], 128, 128, 8
    $region9: #{tpu_custom_call.1} parent=1 // pred_fallthru
      _
    // Predicated region
    $region10: #{tpu_custom_call.1} parent=1 // pred_check
      _
    $region11: #{tpu_custom_call.1} parent=1 // pred_check_branch
      %37 = sbr.rel (0) target = $region13
    $region12: #{tpu_custom_call.1} parent=1 // pred_region
      %39 = vsyncadd [#allocation5], 0
      %s40 = sshll.u32 %s2, 4
      %s41 = int_to_ptr.hbm [resolvable:$true] %s40
      %s42 = sshll.u32 [#allocation6], 4
      %s43 = int_to_ptr.vmem [resolvable:$true] %s42
      %48 = dma.hbm_to_vmem [thread:$0]  %s41, 512, %s43, [#allocation5], 128, 128, 8
    $region13: #{tpu_custom_call.1} parent=1 // pred_fallthru
      _
    // Predicated region
    $region14: #{tpu_custom_call.1} parent=1 // pred_check
      _
    $region15: #{tpu_custom_call.1} parent=1 // pred_check_branch
      %50 = sbr.rel (0) target = $region17
    $region16: #{tpu_custom_call.1} parent=1 // pred_region
      %52 = vsyncadd [#allocation8], 0
      %s54 = sshll.u32 %s3, 4
      %s55 = int_to_ptr.hbm [resolvable:$true] %s54
      %s56 = sshll.u32 [#allocation7], 4
      %s57 = int_to_ptr.vmem [resolvable:$true] %s56
      %59 = dma.hbm_to_vmem [thread:$0]  %s55, 64, %s57, [#allocation8]
    $region17: #{tpu_custom_call.1} parent=1 // pred_fallthru
      _
    // Predicated region
    $region18: #{tpu_custom_call.1} parent=1 // pred_check
      _
    $region19: #{tpu_custom_call.1} parent=1 // pred_check_branch
      %61 = sbr.rel (0) target = $region21
    $region20: #{tpu_custom_call.1} parent=1 // pred_region
      %63 = dma.done [#allocation3], 128
    $region21: #{tpu_custom_call.1} parent=1 // pred_fallthru
      _
    // Predicated region
    $region22: #{tpu_custom_call.1} parent=1 // pred_check
      _
    $region23: #{tpu_custom_call.1} parent=1 // pred_check_branch
      %65 = sbr.rel (0) target = $region25
    $region24: #{tpu_custom_call.1} parent=1 // pred_region
      %67 = dma.done [#allocation5], 256
    $region25: #{tpu_custom_call.1} parent=1 // pred_fallthru
      _
    // Predicated region
    $region26: #{tpu_custom_call.1} parent=1 // pred_check
      _
    $region27: #{tpu_custom_call.1} parent=1 // pred_check_branch
      %69 = sbr.rel (0) target = $region29
    $region28: #{tpu_custom_call.1} parent=1 // pred_region
      %71 = dma.done [#allocation5], 512
    $region29: #{tpu_custom_call.1} parent=1 // pred_fallthru
      _
    // Predicated region
    $region30: #{tpu_custom_call.1} parent=1 // pred_check
      _
    $region31: #{tpu_custom_call.1} parent=1 // pred_check_branch
      %73 = sbr.rel (0) target = $region33
    $region32: #{tpu_custom_call.1} parent=1 // pred_region
      %75 = dma.done [#allocation8], 64
    $region33: #{tpu_custom_call.1} parent=1 // pred_fallthru
      _
    %v76 = vld [vmem:[#allocation2] sm:$0xff]
    %v77 = vld [vmem:[#allocation7] sm:$0x1]
    %v78 = vld [vmem:[#allocation7 + $0x1] sm:$0x1]
    %v79 = vld [vmem:[#allocation7 + $0x2] sm:$0x1]
    %vm80 = vcmask 130048
    %v81 = vsel %vm80, %v76, 0.0
    %v82 = vrot.slane %v81, 4
    %v83 = vadd.f32 %v81, %v82
    %v84 = vrot.slane %v83, 2
    %v85 = vadd.f32 %v83, %v84
    %v86 = vrot.slane %v85, 1
    %v87 = vadd.f32 %v85, %v86
    %v88 = vrcp.pop 8.0
    %v89 = vmul.f32 8.0, %v88
    %v90 = vsub.f32 1.0, %v89
    %v91 = vmul.f32 %v88, %v90
    %v92 = vadd.f32 %v88, %v91
    %vm93 = vweird.f32 %v88
    %v94 = vsel %vm93, %v88, %v92
    %v95 = vmul.f32 %v87, %v94
    %v96 = vsub.f32 %v76, %v95
    %v97 = vmul.f32 %v96, %v96
    %v98 = vsel %vm80, %v97, 0.0
    %v99 = vrot.slane %v98, 4
    %v100 = vadd.f32 %v98, %v99
    %v101 = vrot.slane %v100, 2
    %v102 = vadd.f32 %v100, %v101
    %v103 = vrot.slane %v102, 1
    %v104 = vadd.f32 %v102, %v103
    %v105 = vmul.f32 %v104, %v94
    %v106 = vadd.f32 %v105, 1e-05
    %v107 = vrsqrt.pop %v106
    %v108 = vmul.f32 %v107, %v106
    %v109 = vmul.f32 %v108, %v107
    %v110 = vmul.f32 0.5, %v109
    %v111 = vsub.f32 1.5, %v110
    %v112 = vmul.f32 %v107, %v111
    %vm113 = vweird.f32 %v106
    %vm114 = vweird.f32 %v107
    %vm115 = vmor %vm113, %vm114
    %v116 = vsel %vm115, %v107, %v112
    %v117 = vmul.f32 %v77, %v77
    %v118 = vmul.f32 %v117, %v105
    %v119 = vmul.f32 %v116, %v116
    %v120 = vmul.f32 %v118, %v119
    %v121 = vadd.f32 %v120, 1e-05
    %v122 = vrsqrt.pop %v121
    %v123 = vmul.f32 %v122, %v121
    %v124 = vmul.f32 %v123, %v122
    %v125 = vmul.f32 0.5, %v124
    %v126 = vsub.f32 1.5, %v125
    %v127 = vmul.f32 %v122, %v126
    %vm128 = vweird.f32 %v121
    %vm129 = vweird.f32 %v122
    %vm130 = vmor %vm128, %vm129
    %v131 = vsel %vm130, %v122, %v127
    %v132 = vmul.f32 %v116, %v77
    %v133 = vmul.f32 %v132, %v131
    %135 = vrot.lane.b32.xlu0 %v77, 112
    %v136 = vpop.permute.xlu0 %135
    %v138 = vmul.f32 %v133, %v136
    %v139 = vperm.slane %v138, 0
    %v140 = vmul.f32 %v96, %v139
    %v141 = vperm.slane %v77, 0
    %143 = vrot.lane.b32.xlu0 %v141, 96
    %v144 = vpop.permute.xlu0 %143
    %v146 = vadd.f32 %v140, %v144
    %v147 = vld [vmem:[#allocation4] sm:$0xff]
    %v148 = vld [vmem:[#allocation4 + $0x8] sm:$0xff]
    %v149 = vperm.slane %v78, 0
    %v151 = vsel %vm80, %v146, 0
    %153 = vmatpush.msra.mxu0 0.0
    %154 = vmatpush.msra.mxu0 0.0
    %155 = vmatpush.msra.mxu0 0.0
    %156 = vmatpush.msra.mxu0 0.0
    %157 = vmatpush.msra.mxu0 0.0
    %158 = vmatpush.msra.mxu0 0.0
    %159 = vmatpush.msra.mxu0 0.0
    %160 = vmatpush.msra.mxu0 0.0
    %161 = vmatpush.msra.mxu0 0.0
    %162 = vmatpush.msra.mxu0 0.0
    %163 = vmatpush.msra.mxu0 0.0
    %164 = vmatpush.msra.mxu0 0.0
    %165 = vmatpush.msra.mxu0 0.0
    %166 = vmatpush.msra.mxu0 0.0
    %167 = vmatpush.msra.mxu0 %v148
    %168 = vmatpush.msra.mxu0 %v147
    %169 = vmatmul.f32.gmra.mxu0 %v151
    %v170 = vpop.f32.mrf.mxu0
    %v171 = vadd.f32 %v149, %v170
    %172 = vdwg.mxu0
    %v173 = vld [vmem:[#allocation6] sm:$0xff]
    %v174 = vld [vmem:[#allocation6 + $0x8] sm:$0xff]
    %v175 = vld [vmem:[#allocation6 + $0x10] sm:$0xff]
    %v176 = vld [vmem:[#allocation6 + $0x18] sm:$0xff]
    %vm177 = vcmask 261120
    %v179 = vsel %vm177, 0.0, 0
    %181 = vmatpush.msra.mxu0 0.0
    %182 = vmatpush.msra.mxu0 0.0
    %183 = vmatpush.msra.mxu0 0.0
    %184 = vmatpush.msra.mxu0 0.0
    %185 = vmatpush.msra.mxu0 0.0
    %186 = vmatpush.msra.mxu0 0.0
    %187 = vmatpush.msra.mxu0 0.0
    %188 = vmatpush.msra.mxu0 0.0
    %189 = vmatpush.msra.mxu0 0.0
    %190 = vmatpush.msra.mxu0 0.0
    %191 = vmatpush.msra.mxu0 0.0
    %192 = vmatpush.msra.mxu0 0.0
    %193 = vmatpush.msra.mxu0 %v176
    %194 = vmatpush.msra.mxu0 %v175
    %195 = vmatpush.msra.mxu0 %v174
    %196 = vmatpush.msra.mxu0 %v173
    %197 = vmatmul.f32.gmra.mxu0 %v179
    %v198 = vpop.f32.mrf.mxu0
    %v199 = vadd.f32 0.0, %v198
    %200 = vdwg.mxu0
    %v201 = vadd.f32 %v171, %v199
    %v202 = vmul.f32 %v201, %v79
    %v203 = vtanh.pop %v202
    %v204 = vmul.f32 %v203, 0.5
    %v205 = vadd.f32 %v204, 0.5
    %v206 = vmul.f32 %v205, 0.0
    %208 = vrot.lane.b32.xlu0 %v203, 64
    %v209 = vpop.permute.xlu0 %208
    %v211 = vmul.f32 %v205, %v209
    %213 = vrot.lane.b32.xlu0 %v211, 32
    %v214 = vpop.permute.xlu0 %213
    %v216 = vadd.f32 %v206, %v214
    %v217 = vtanh.pop %v216
    %219 = vrot.lane.b32.xlu0 %v217, 64
    %v220 = vpop.permute.xlu0 %219
    %v222 = vmul.f32 %v205, %v220
    %224 = vrot.lane.b32.xlu0 %v222, 32
    %v225 = vpop.permute.xlu0 %224
    %v226 = vsel %vm177, %v225, 0
    %228 = vmatpush.msra.mxu0 0.0
    %229 = vmatpush.msra.mxu0 0.0
    %230 = vmatpush.msra.mxu0 0.0
    %231 = vmatpush.msra.mxu0 0.0
    %232 = vmatpush.msra.mxu0 0.0
    %233 = vmatpush.msra.mxu0 0.0
    %234 = vmatpush.msra.mxu0 0.0
    %235 = vmatpush.msra.mxu0 0.0
    %236 = vmatpush.msra.mxu0 0.0
    %237 = vmatpush.msra.mxu0 0.0
    %238 = vmatpush.msra.mxu0 0.0
    %239 = vmatpush.msra.mxu0 0.0
    %240 = vmatpush.msra.mxu0 %v176
    %241 = vmatpush.msra.mxu0 %v175
    %242 = vmatpush.msra.mxu0 %v174
    %243 = vmatpush.msra.mxu0 %v173
    %244 = vmatmul.f32.gmra.mxu0 %v226
    %v245 = vpop.f32.mrf.mxu0
    %v246 = vadd.f32 0.0, %v245
    %247 = vdwg.mxu0
    %v249 = vrot.slane %v246, 7
    %v251 = vadd.f32 %v171, %v249
    %v253 = vrot.slane %v79, 7
    %v255 = vmul.f32 %v251, %v253
    %v256 = vtanh.pop %v255
    %v257 = vmul.f32 %v256, 0.5
    %v258 = vadd.f32 %v257, 0.5
    %v260 = vrot.slane %v216, 7
    %v262 = vmul.f32 %v258, %v260
    %264 = vrot.lane.b32.xlu0 %v256, 64
    %v265 = vpop.permute.xlu0 %264
    %v267 = vmul.f32 %v258, %v265
    %269 = vrot.lane.b32.xlu0 %v267, 32
    %v270 = vpop.permute.xlu0 %269
    %v272 = vadd.f32 %v262, %v270
    %v273 = vtanh.pop %v272
    %275 = vrot.lane.b32.xlu0 %v273, 64
    %v276 = vpop.permute.xlu0 %275
    %v278 = vmul.f32 %v258, %v276
    %v280 = vrot.slane %v278, 1
    %281 = vrot.lane.b32.xlu0 %v280, 32
    %v282 = vpop.permute.xlu0 %281
    %v283 = vsel %vm177, %v282, 0
    %285 = vmatpush.msra.mxu0 0.0
    %286 = vmatpush.msra.mxu0 0.0
    %287 = vmatpush.msra.mxu0 0.0
    %288 = vmatpush.msra.mxu0 0.0
    %289 = vmatpush.msra.mxu0 0.0
    %290 = vmatpush.msra.mxu0 0.0
    %291 = vmatpush.msra.mxu0 0.0
    %292 = vmatpush.msra.mxu0 0.0
    %293 = vmatpush.msra.mxu0 0.0
    %294 = vmatpush.msra.mxu0 0.0
    %295 = vmatpush.msra.mxu0 0.0
    %296 = vmatpush.msra.mxu0 0.0
    %297 = vmatpush.msra.mxu0 %v176
    %298 = vmatpush.msra.mxu0 %v175
    %299 = vmatpush.msra.mxu0 %v174
    %300 = vmatpush.msra.mxu0 %v173
    %301 = vmatmul.f32.gmra.mxu0 %v283
    %v302 = vpop.f32.mrf.mxu0
    %v303 = vadd.f32 0.0, %v302
    %304 = vdwg.mxu0
    %v306 = vrot.slane %v303, 6
    %v308 = vadd.f32 %v171, %v306
    %v309 = vrot.slane %v79, 6
    %v311 = vmul.f32 %v308, %v309
    %v312 = vtanh.pop %v311
    %v313 = vmul.f32 %v312, 0.5
    %v314 = vadd.f32 %v313, 0.5
    %v316 = vrot.slane %v272, 7
    %v318 = vmul.f32 %v314, %v316
    %320 = vrot.lane.b32.xlu0 %v312, 64
    %v321 = vpop.permute.xlu0 %320
    %v323 = vmul.f32 %v314, %v321
    %325 = vrot.lane.b32.xlu0 %v323, 32
    %v326 = vpop.permute.xlu0 %325
    %v328 = vadd.f32 %v318, %v326
    %v329 = vtanh.pop %v328
    %331 = vrot.lane.b32.xlu0 %v329, 64
    %v332 = vpop.permute.xlu0 %331
    %v334 = vmul.f32 %v314, %v332
    %v336 = vrot.slane %v334, 2
    %337 = vrot.lane.b32.xlu0 %v336, 32
    %v338 = vpop.permute.xlu0 %337
    %v339 = vsel %vm177, %v338, 0
    %341 = vmatpush.msra.mxu0 0.0
    %342 = vmatpush.msra.mxu0 0.0
    %343 = vmatpush.msra.mxu0 0.0
    %344 = vmatpush.msra.mxu0 0.0
    %345 = vmatpush.msra.mxu0 0.0
    %346 = vmatpush.msra.mxu0 0.0
    %347 = vmatpush.msra.mxu0 0.0
    %348 = vmatpush.msra.mxu0 0.0
    %349 = vmatpush.msra.mxu0 0.0
    %350 = vmatpush.msra.mxu0 0.0
    %351 = vmatpush.msra.mxu0 0.0
    %352 = vmatpush.msra.mxu0 0.0
    %353 = vmatpush.msra.mxu0 %v176
    %354 = vmatpush.msra.mxu0 %v175
    %355 = vmatpush.msra.mxu0 %v174
    %356 = vmatpush.msra.mxu0 %v173
    %357 = vmatmul.f32.gmra.mxu0 %v339
    %v358 = vpop.f32.mrf.mxu0
    %v359 = vadd.f32 0.0, %v358
    %360 = vdwg.mxu0
    %v362 = vrot.slane %v359, 5
    %v364 = vadd.f32 %v171, %v362
    %v365 = vrot.slane %v79, 5
    %v367 = vmul.f32 %v364, %v365
    %v368 = vtanh.pop %v367
    %v369 = vmul.f32 %v368, 0.5
    %v370 = vadd.f32 %v369, 0.5
    %v372 = vrot.slane %v328, 7
    %v374 = vmul.f32 %v370, %v372
    %376 = vrot.lane.b32.xlu0 %v368, 64
    %v377 = vpop.permute.xlu0 %376
    %v379 = vmul.f32 %v370, %v377
    %381 = vrot.lane.b32.xlu0 %v379, 32
    %v382 = vpop.permute.xlu0 %381
    %v384 = vadd.f32 %v374, %v382
    %v385 = vtanh.pop %v384
    %387 = vrot.lane.b32.xlu0 %v385, 64
    %v388 = vpop.permute.xlu0 %387
    %v390 = vmul.f32 %v370, %v388
    %v392 = vrot.slane %v390, 3
    %393 = vrot.lane.b32.xlu0 %v392, 32
    %v394 = vpop.permute.xlu0 %393
    %v395 = vsel %vm177, %v394, 0
    %397 = vmatpush.msra.mxu0 0.0
    %398 = vmatpush.msra.mxu0 0.0
    %399 = vmatpush.msra.mxu0 0.0
    %400 = vmatpush.msra.mxu0 0.0
    %401 = vmatpush.msra.mxu0 0.0
    %402 = vmatpush.msra.mxu0 0.0
    %403 = vmatpush.msra.mxu0 0.0
    %404 = vmatpush.msra.mxu0 0.0
    %405 = vmatpush.msra.mxu0 0.0
    %406 = vmatpush.msra.mxu0 0.0
    %407 = vmatpush.msra.mxu0 0.0
    %408 = vmatpush.msra.mxu0 0.0
    %409 = vmatpush.msra.mxu0 %v176
    %410 = vmatpush.msra.mxu0 %v175
    %411 = vmatpush.msra.mxu0 %v174
    %412 = vmatpush.msra.mxu0 %v173
    %413 = vmatmul.f32.gmra.mxu0 %v395
    %v414 = vpop.f32.mrf.mxu0
    %v415 = vadd.f32 0.0, %v414
    %416 = vdwg.mxu0
    %v418 = vrot.slane %v415, 4
    %v420 = vadd.f32 %v171, %v418
    %v421 = vrot.slane %v79, 4
    %v423 = vmul.f32 %v420, %v421
    %v424 = vtanh.pop %v423
    %v425 = vmul.f32 %v424, 0.5
    %v426 = vadd.f32 %v425, 0.5
    %v428 = vrot.slane %v384, 7
    %v430 = vmul.f32 %v426, %v428
    %432 = vrot.lane.b32.xlu0 %v424, 64
    %v433 = vpop.permute.xlu0 %432
    %v435 = vmul.f32 %v426, %v433
    %437 = vrot.lane.b32.xlu0 %v435, 32
    %v438 = vpop.permute.xlu0 %437
    %v440 = vadd.f32 %v430, %v438
    %v441 = vtanh.pop %v440
    %443 = vrot.lane.b32.xlu0 %v441, 64
    %v444 = vpop.permute.xlu0 %443
    %v446 = vmul.f32 %v426, %v444
    %v448 = vrot.slane %v446, 4
    %449 = vrot.lane.b32.xlu0 %v448, 32
    %v450 = vpop.permute.xlu0 %449
    %v451 = vsel %vm177, %v450, 0
    %453 = vmatpush.msra.mxu0 0.0
    %454 = vmatpush.msra.mxu0 0.0
    %455 = vmatpush.msra.mxu0 0.0
    %456 = vmatpush.msra.mxu0 0.0
    %457 = vmatpush.msra.mxu0 0.0
    %458 = vmatpush.msra.mxu0 0.0
    %459 = vmatpush.msra.mxu0 0.0
    %460 = vmatpush.msra.mxu0 0.0
    %461 = vmatpush.msra.mxu0 0.0
    %462 = vmatpush.msra.mxu0 0.0
    %463 = vmatpush.msra.mxu0 0.0
    %464 = vmatpush.msra.mxu0 0.0
    %465 = vmatpush.msra.mxu0 %v176
    %466 = vmatpush.msra.mxu0 %v175
    %467 = vmatpush.msra.mxu0 %v174
    %468 = vmatpush.msra.mxu0 %v173
    %469 = vmatmul.f32.gmra.mxu0 %v451
    %v470 = vpop.f32.mrf.mxu0
    %v471 = vadd.f32 0.0, %v470
    %472 = vdwg.mxu0
    %v474 = vrot.slane %v471, 3
    %v476 = vadd.f32 %v171, %v474
    %v477 = vrot.slane %v79, 3
    %v479 = vmul.f32 %v476, %v477
    %v480 = vtanh.pop %v479
    %v481 = vmul.f32 %v480, 0.5
    %v482 = vadd.f32 %v481, 0.5
    %v484 = vrot.slane %v440, 7
    %v486 = vmul.f32 %v482, %v484
    %488 = vrot.lane.b32.xlu0 %v480, 64
    %v489 = vpop.permute.xlu0 %488
    %v491 = vmul.f32 %v482, %v489
    %493 = vrot.lane.b32.xlu0 %v491, 32
    %v494 = vpop.permute.xlu0 %493
    %v496 = vadd.f32 %v486, %v494
    %v497 = vtanh.pop %v496
    %499 = vrot.lane.b32.xlu0 %v497, 64
    %v500 = vpop.permute.xlu0 %499
    %v502 = vmul.f32 %v482, %v500
    %v504 = vrot.slane %v502, 5
    %505 = vrot.lane.b32.xlu0 %v504, 32
    %v506 = vpop.permute.xlu0 %505
    %v507 = vsel %vm177, %v506, 0
    %509 = vmatpush.msra.mxu0 0.0
    %510 = vmatpush.msra.mxu0 0.0
    %511 = vmatpush.msra.mxu0 0.0
    %512 = vmatpush.msra.mxu0 0.0
    %513 = vmatpush.msra.mxu0 0.0
    %514 = vmatpush.msra.mxu0 0.0
    %515 = vmatpush.msra.mxu0 0.0
    %516 = vmatpush.msra.mxu0 0.0
    %517 = vmatpush.msra.mxu0 0.0
    %518 = vmatpush.msra.mxu0 0.0
    %519 = vmatpush.msra.mxu0 0.0
    %520 = vmatpush.msra.mxu0 0.0
    %521 = vmatpush.msra.mxu0 %v176
    %522 = vmatpush.msra.mxu0 %v175
    %523 = vmatpush.msra.mxu0 %v174
    %524 = vmatpush.msra.mxu0 %v173
    %525 = vmatmul.f32.gmra.mxu0 %v507
    %v526 = vpop.f32.mrf.mxu0
    %v527 = vadd.f32 0.0, %v526
    %528 = vdwg.mxu0
    %v530 = vrot.slane %v527, 2
    %v532 = vadd.f32 %v171, %v530
    %v533 = vrot.slane %v79, 2
    %v535 = vmul.f32 %v532, %v533
    %v536 = vtanh.pop %v535
    %v537 = vmul.f32 %v536, 0.5
    %v538 = vadd.f32 %v537, 0.5
    %v540 = vrot.slane %v496, 7
    %v542 = vmul.f32 %v538, %v540
    %544 = vrot.lane.b32.xlu0 %v536, 64
    %v545 = vpop.permute.xlu0 %544
    %v547 = vmul.f32 %v538, %v545
    %549 = vrot.lane.b32.xlu0 %v547, 32
    %v550 = vpop.permute.xlu0 %549
    %v552 = vadd.f32 %v542, %v550
    %v553 = vtanh.pop %v552
    %555 = vrot.lane.b32.xlu0 %v553, 64
    %v556 = vpop.permute.xlu0 %555
    %v558 = vmul.f32 %v538, %v556
    %v560 = vrot.slane %v558, 6
    %561 = vrot.lane.b32.xlu0 %v560, 32
    %v562 = vpop.permute.xlu0 %561
    %v563 = vsel %vm177, %v562, 0
    %565 = vmatpush.msra.mxu0 0.0
    %566 = vmatpush.msra.mxu0 0.0
    %567 = vmatpush.msra.mxu0 0.0
    %568 = vmatpush.msra.mxu0 0.0
    %569 = vmatpush.msra.mxu0 0.0
    %570 = vmatpush.msra.mxu0 0.0
    %571 = vmatpush.msra.mxu0 0.0
    %572 = vmatpush.msra.mxu0 0.0
    %573 = vmatpush.msra.mxu0 0.0
    %574 = vmatpush.msra.mxu0 0.0
    %575 = vmatpush.msra.mxu0 0.0
    %576 = vmatpush.msra.mxu0 0.0
    %577 = vmatpush.msra.mxu0 %v176
    %578 = vmatpush.msra.mxu0 %v175
    %579 = vmatpush.msra.mxu0 %v174
    %580 = vmatpush.msra.mxu0 %v173
    %581 = vmatmul.f32.gmra.mxu0 %v563
    %v582 = vpop.f32.mrf.mxu0
    %v583 = vadd.f32 0.0, %v582
    %584 = vdwg.mxu0
    %v586 = vrot.slane %v583, 1
    %v588 = vadd.f32 %v171, %v586
    %v589 = vrot.slane %v79, 1
    %v591 = vmul.f32 %v588, %v589
    %v592 = vtanh.pop %v591
    %v593 = vmul.f32 %v592, 0.5
    %v594 = vadd.f32 %v593, 0.5
    %v596 = vrot.slane %v552, 7
    %v598 = vmul.f32 %v594, %v596
    %600 = vrot.lane.b32.xlu0 %v592, 64
    %v601 = vpop.permute.xlu0 %600
    %v603 = vmul.f32 %v594, %v601
    %605 = vrot.lane.b32.xlu0 %v603, 32
    %v606 = vpop.permute.xlu0 %605
    %v608 = vadd.f32 %v598, %v606
    %v609 = vtanh.pop %v608
    %611 = vrot.lane.b32.xlu0 %v609, 64
    %v612 = vpop.permute.xlu0 %611
    %v614 = vmul.f32 %v594, %v612
    %vm615 = vcmask 1040384
    %v616 = vsel %vm615, %v222, %v278
    %vm617 = vcmask 1041408
    %v618 = vsel %vm617, %v616, %v334
    %vm619 = vcmask 1042432
    %v620 = vsel %vm619, %v618, %v390
    %vm621 = vcmask 1043456
    %v622 = vsel %vm621, %v620, %v446
    %vm623 = vcmask 1044480
    %v624 = vsel %vm623, %v622, %v502
    %vm625 = vcmask 1045504
    %v626 = vsel %vm625, %v624, %v558
    %vm627 = vcmask 1046528
    %v628 = vsel %vm627, %v626, %v614
    %vm629 = vcmask 1048320
    %v630 = vsel %vm629, %v628, 0.0
    %v631 = vrot.slane %v630, 4
    %v632 = vadd.f32 %v630, %v631
    %v633 = vrot.slane %v632, 2
    %v634 = vadd.f32 %v632, %v633
    %v635 = vrot.slane %v634, 1
    %v636 = vadd.f32 %v634, %v635
    %v637 = vmul.f32 %v636, %v94
    %v638 = vsub.f32 %v628, %v637
    %v639 = vmul.f32 %v638, %v638
    %v640 = vsel %vm629, %v639, 0.0
    %v641 = vrot.slane %v640, 4
    %v642 = vadd.f32 %v640, %v641
    %v643 = vrot.slane %v642, 2
    %v644 = vadd.f32 %v642, %v643
    %v645 = vrot.slane %v644, 1
    %v646 = vadd.f32 %v644, %v645
    %v647 = vmul.f32 %v646, %v94
    %v648 = vadd.f32 %v647, 1e-05
    %v649 = vrsqrt.pop %v648
    %v650 = vmul.f32 %v649, %v648
    %v651 = vmul.f32 %v650, %v649
    %v652 = vmul.f32 0.5, %v651
    %v653 = vsub.f32 1.5, %v652
    %v654 = vmul.f32 %v649, %v653
    %vm655 = vweird.f32 %v648
    %vm656 = vweird.f32 %v649
    %vm657 = vmor %vm655, %vm656
    %v658 = vsel %vm657, %v649, %v654
    %659 = vrot.lane.b32.xlu0 %v77, 48
    %v660 = vpop.permute.xlu0 %659
    %v662 = vmul.f32 %v658, %v660
    %v663 = vperm.slane %v662, 0
    %v664 = vmul.f32 %v638, %v663
    %666 = vrot.lane.b32.xlu0 %v664, 32
    %v667 = vpop.permute.xlu0 %666
    %v669 = vsel %vm177, %v667, 0.0
    %670 = vadd.xlane.f32.xlu0 %v669
    %v671 = vpop.xlane.xlu0 %670
    %v672 = vadd.f32 %v671, %v141
    %v673 = vmax.f32 %v672, 0.0
    %675 = vrot.lane.b32.xlu0 %v673, 48
    %v676 = vpop.permute.xlu0 %675
    %vm678 = vcmask 7168
    %679 = vst.msk [vmem:[%s4] sm:$0xff] %vm678, %v676
    // Predicated region
    $region34: #{tpu_custom_call.1} parent=1 // pred_check
      _
    $region35: #{tpu_custom_call.1} parent=1 // pred_check_branch
      %681 = sbr.rel (0) target = $region37
    $region36: #{tpu_custom_call.1} parent=1 // pred_region
      _
    $region37: #{tpu_custom_call.1} parent=1 // pred_fallthru
      _
    // Predicated region
    $region38: #{tpu_custom_call.1} parent=1 // pred_check
      _
    $region39: #{tpu_custom_call.1} parent=1 // pred_check_branch
      %683 = sbr.rel (0) target = $region41
    $region40: #{tpu_custom_call.1} parent=1 // pred_region
      _
    $region41: #{tpu_custom_call.1} parent=1 // pred_fallthru
      _
    %684 = vsyncpa [#allocation3], 1
    %685 = vsyncpa [#allocation5], 1
    %686 = vsyncpa [#allocation8], 1

</llo_original>
